<compile_context>
chip_gen: v5e
topology: v5e:2x2
jax: 0.10.0
libtpu: 0.0.40
codegen_flags: <defaults>
</compile_context>

<pallas_src>
import jax
import jax.numpy as jnp
from jax.experimental import pallas as pl
from jax.experimental.pallas import tpu as pltpu


def rnn_forward(x, params):
    """x: (B, T, input_size) float32.  Returns (B, num_classes) float32."""
    (wih1, whh1, bih1, bhh1,
     wih2, whh2, bih2, bhh2,
     wfc, bfc) = params

    B, T, I = x.shape
    H = whh1.shape[0]
    C = wfc.shape[0]
    BP = ((B + 7) // 8) * 8  # pad batch to a sublane multiple

    # ---- wrapper-side layout plumbing (cheap XLA ops, no compute hoisting) ----
    # time-major, batch padded, flattened so the whole layer-1 input projection
    # is one matmul inside the kernel.
    x_tm = jnp.transpose(x, (1, 0, 2))                      # (T, B, I)
    x_tm = jnp.pad(x_tm, ((0, 0), (0, BP - B), (0, 0)))     # (T, BP, I)
    xf = x_tm.reshape(T * BP, I).astype(jnp.bfloat16)       # (T*BP, I) bf16

    wih1_t = wih1.T.astype(jnp.bfloat16)                    # (I, H)
    whh1_t = whh1.T.astype(jnp.bfloat16)                    # (H, H)
    wih2_t = wih2.T.astype(jnp.bfloat16)                    # (H, H)
    whh2_t = whh2.T                                         # (H, H) f32 (packed below)
    b1 = (bih1 + bhh1).reshape(1, H).astype(jnp.float32)
    b2 = (bih2 + bhh2).reshape(1, H).astype(jnp.float32)

    # fc weight rearranged so the PyTorch reshape(B, T*H) flatten order (T major
    # over H) is preserved:  logits[b,c] = sum_t  h2_t[b,:] @ wfc3[t,:,c]
    wfc3 = wfc.reshape(C, T, H).transpose(1, 2, 0)          # (T, H, C)
    # Lane-pack the two consumers of h2_t into one operand:
    #   w2cat[t] = [ Whh2^T | wfc3[t] ]   ->  (T, H, H+C)
    w2cat = jnp.concatenate(
        [jnp.broadcast_to(whh2_t[None], (T, H, H)), wfc3], axis=-1
    ).astype(jnp.bfloat16)                                  # (T, H, H+C)
    bfc2 = bfc.reshape(1, C).astype(jnp.float32)

    def kernel(xf_ref, wih1_ref, whh1_ref, b1_ref,
               wih2_ref, b2_ref, w2cat_ref, bfc_ref, out_ref):
        # Hoisted layer-1 input projection: all timesteps in ONE bf16 MXU call,
        # kept live in vregs (no scratch store/reload).
        xp = jnp.dot(xf_ref[...], wih1_ref[...],
                     preferred_element_type=jnp.float32)    # (T*BP, H) f32

        # Hoist weight/bias loads out of the (unrolled) time loop.
        whh1_v = whh1_ref[...]                              # bf16 (H, H)
        wih2_v = wih2_ref[...]                              # bf16 (H, H)
        b1_v = b1_ref[...]                                  # f32 (1, H)
        b2_v = b2_ref[...]                                  # f32 (1, H)

        # Loop-carried values live purely in vregs.
        h1 = jnp.zeros((BP, H), jnp.float32)
        rec = jnp.zeros((BP, H), jnp.float32)       # = h2_{t-1} @ Whh2^T (h2_0 = 0)
        acc = jnp.zeros((BP, H + C), jnp.float32)   # lanes [H:] hold the FC logits

        # T is small & static -> fully unrolled; all slice offsets are static
        # and sublane-aligned (BP = 8k).  For large T use
        # lax.fori_loop(0, T, body, init, unroll=4..8) with pl.ds(t*BP, BP).
        for t in range(T):
            x1 = xp[t * BP:(t + 1) * BP, :]                          # (BP, H) f32
            h1 = jnp.tanh(
                x1 + b1_v
                + jnp.dot(h1.astype(jnp.bfloat16), whh1_v,
                          preferred_element_type=jnp.float32))
            h2 = jnp.tanh(
                jnp.dot(h1.astype(jnp.bfloat16), wih2_v,
                        preferred_element_type=jnp.float32)
                + b2_v + rec)
            # One matmul feeds both consumers of h2_t:
            #   r[:, :H] = h2_t @ Whh2^T   (next-step recurrent term)
            #   r[:, H:] = h2_t @ wfc3[t]  (FC-head contribution)
            r = jnp.dot(h2.astype(jnp.bfloat16), w2cat_ref[t],
                        preferred_element_type=jnp.float32)          # (BP, H+C)
            rec = r[:, :H]
            acc = acc + r

        out_ref[...] = (acc[:, H:] + bfc_ref[...]).astype(out_ref.dtype)

    logits_p = pl.pallas_call(
        kernel,
        out_shape=jax.ShapeDtypeStruct((BP, C), jnp.float32),
        grid=(),
        in_specs=[
            pl.BlockSpec((T * BP, I), lambda: (0, 0)),       # flattened x (bf16)
            pl.BlockSpec((I, H), lambda: (0, 0)),            # Wih1^T (bf16)
            pl.BlockSpec((H, H), lambda: (0, 0)),            # Whh1^T (bf16)
            pl.BlockSpec((1, H), lambda: (0, 0)),            # b1 (f32)
            pl.BlockSpec((H, H), lambda: (0, 0)),            # Wih2^T (bf16)
            pl.BlockSpec((1, H), lambda: (0, 0)),            # b2 (f32)
            pl.BlockSpec((T, H, H + C), lambda: (0, 0, 0)),  # [Whh2^T | fc_t] (bf16)
            pl.BlockSpec((1, C), lambda: (0, 0)),            # fc bias (f32)
        ],
        out_specs=pl.BlockSpec((BP, C), lambda: (0, 0)),
    )(xf, wih1_t, whh1_t, b1, wih2_t, b2, w2cat, bfc2)

    return logits_p[:B]


# ----------------------------------------------------------------------------
# Pure-JAX reference (mirrors nn.RNN(tanh, 2 layers, batch_first) + nn.Linear).
# ----------------------------------------------------------------------------
def rnn_forward_ref(x, params):
    (wih1, whh1, bih1, bhh1, wih2, whh2, bih2, bhh2, wfc, bfc) = params
    B, T, _ = x.shape
    H = whh1.shape[0]

    def step(carry, x_t):
        h1, h2 = carry
        h1 = jnp.tanh(x_t @ wih1.T + bih1 + h1 @ whh1.T + bhh1)
        h2 = jnp.tanh(h1 @ wih2.T + bih2 + h2 @ whh2.T + bhh2)
        return (h1, h2), h2

    h0 = (jnp.zeros((B, H), jnp.float32), jnp.zeros((B, H), jnp.float32))
    _, outs = jax.lax.scan(step, h0, jnp.transpose(x, (1, 0, 2)))  # (T, B, H)
    out_flat = jnp.transpose(outs, (1, 0, 2)).reshape(B, -1)
    return out_flat @ wfc.T + bfc


if __name__ == "__main__":
    # Small shapes consistent with the module (scaled down): batch=2, seq=8,
    # input=28, hidden=32, layers=2, classes=10.
    B, T, I, H, C = 2, 8, 28, 32, 10

    key = jax.random.PRNGKey(0)
    ks = jax.random.split(key, 11)
    s = 1.0 / jnp.sqrt(H)

    def u(k, shape):
        return jax.random.uniform(k, shape, jnp.float32, -s, s)

    params = (
        u(ks[0], (H, I)),      # W_ih layer 1
        u(ks[1], (H, H)),      # W_hh layer 1
        u(ks[2], (H,)),        # b_ih layer 1
        u(ks[3], (H,)),        # b_hh layer 1
        u(ks[4], (H, H)),      # W_ih layer 2
        u(ks[5], (H, H)),      # W_hh layer 2
        u(ks[6], (H,)),        # b_ih layer 2
        u(ks[7], (H,)),        # b_hh layer 2
        u(ks[8], (C, T * H)),  # fc weight
        u(ks[9], (C,)),        # fc bias
    )

    x = jax.random.normal(ks[10], (B, T, I), jnp.float32)

    fwd = jax.jit(rnn_forward)
    out = jax.block_until_ready(fwd(x, params))
    ref = jax.block_until_ready(rnn_forward_ref(x, params))

    assert out.shape == (B, C), out.shape
    # Tolerance loosened vs the f32 version: MXU operands are bf16 now
    # (per the perf review), which costs ~1e-2 absolute on the logits.
    assert jnp.allclose(out, ref, atol=5e-2, rtol=5e-2), (out, ref)
    print("KERNEL_OK")
</pallas_src>

<mosaic_0001>
module attributes {stable_mosaic.version = 11 : i64} {
  func.func @kernel(%arg0: memref<64x28xbf16, #tpu.memory_space<vmem>>, %arg1: memref<28x32xbf16, #tpu.memory_space<vmem>>, %arg2: memref<32x32xbf16, #tpu.memory_space<vmem>>, %arg3: memref<1x32xf32, #tpu.memory_space<vmem>>, %arg4: memref<32x32xbf16, #tpu.memory_space<vmem>>, %arg5: memref<1x32xf32, #tpu.memory_space<vmem>>, %arg6: memref<8x32x42xbf16, #tpu.memory_space<vmem>>, %arg7: memref<1x10xf32, #tpu.memory_space<vmem>>, %arg8: memref<8x10xf32, #tpu.memory_space<vmem>>) attributes {dimension_semantics = [], scalar_prefetch = 0 : i64, scratch_operands = 0 : i64, tpu.core_type = #tpu.core_type<tc>} {
    %c0 = arith.constant 0 : index
    %c0_0 = arith.constant 0 : index
    %0 = vector.load %arg0[%c0, %c0_0] : memref<64x28xbf16, #tpu.memory_space<vmem>>, vector<64x28xbf16>
    %c0_1 = arith.constant 0 : index
    %c0_2 = arith.constant 0 : index
    %1 = vector.load %arg1[%c0_1, %c0_2] : memref<28x32xbf16, #tpu.memory_space<vmem>>, vector<28x32xbf16>
    %cst = arith.constant dense<0.000000e+00> : vector<64x32xf32>
    %2 = tpu.matmul %0, %1, %cst {dimension_numbers = #tpu.dot_dimension_numbers<[1], [0], [0], [1], [0, 0, 1, 1], [], []>} : vector<64x28xbf16>, vector<28x32xbf16>, vector<64x32xf32> -> vector<64x32xf32>
    %c0_3 = arith.constant 0 : index
    %c0_4 = arith.constant 0 : index
    %3 = vector.load %arg2[%c0_3, %c0_4] : memref<32x32xbf16, #tpu.memory_space<vmem>>, vector<32x32xbf16>
    %c0_5 = arith.constant 0 : index
    %c0_6 = arith.constant 0 : index
    %4 = vector.load %arg4[%c0_5, %c0_6] : memref<32x32xbf16, #tpu.memory_space<vmem>>, vector<32x32xbf16>
    %c0_7 = arith.constant 0 : index
    %c0_8 = arith.constant 0 : index
    %5 = vector.load %arg3[%c0_7, %c0_8] : memref<1x32xf32, #tpu.memory_space<vmem>>, vector<1x32xf32>
    %c0_9 = arith.constant 0 : index
    %c0_10 = arith.constant 0 : index
    %6 = vector.load %arg5[%c0_9, %c0_10] : memref<1x32xf32, #tpu.memory_space<vmem>>, vector<1x32xf32>
    %cst_11 = arith.constant 0.000000e+00 : f32
    %7 = vector.broadcast %cst_11 : f32 to vector<8x32xf32>
    %cst_12 = arith.constant 0.000000e+00 : f32
    %8 = vector.broadcast %cst_12 : f32 to vector<8x32xf32>
    %cst_13 = arith.constant 0.000000e+00 : f32
    %9 = vector.broadcast %cst_13 : f32 to vector<8x42xf32>
    %10 = vector.extract_strided_slice %2 {offsets = [0, 0], sizes = [8, 32], strides = [1, 1]} : vector<64x32xf32> to vector<8x32xf32>
    %11 = vector.broadcast %5 : vector<1x32xf32> to vector<8x32xf32>
    %12 = arith.addf %10, %11 : vector<8x32xf32>
    %13 = arith.truncf %7 : vector<8x32xf32> to vector<8x32xbf16>
    %cst_14 = arith.constant dense<0.000000e+00> : vector<8x32xf32>
    %14 = tpu.matmul %13, %3, %cst_14 {dimension_numbers = #tpu.dot_dimension_numbers<[1], [0], [0], [1], [0, 0, 1, 1], [], []>} : vector<8x32xbf16>, vector<32x32xbf16>, vector<8x32xf32> -> vector<8x32xf32>
    %15 = arith.addf %12, %14 : vector<8x32xf32>
    %16 = math.tanh %15 : vector<8x32xf32>
    %17 = arith.truncf %16 : vector<8x32xf32> to vector<8x32xbf16>
    %cst_15 = arith.constant dense<0.000000e+00> : vector<8x32xf32>
    %18 = tpu.matmul %17, %4, %cst_15 {dimension_numbers = #tpu.dot_dimension_numbers<[1], [0], [0], [1], [0, 0, 1, 1], [], []>} : vector<8x32xbf16>, vector<32x32xbf16>, vector<8x32xf32> -> vector<8x32xf32>
    %19 = vector.broadcast %6 : vector<1x32xf32> to vector<8x32xf32>
    %20 = arith.addf %18, %19 : vector<8x32xf32>
    %21 = arith.addf %20, %8 : vector<8x32xf32>
    %22 = math.tanh %21 : vector<8x32xf32>
    %23 = arith.truncf %22 : vector<8x32xf32> to vector<8x32xbf16>
    %c0_16 = arith.constant 0 : index
    %c0_17 = arith.constant 0 : index
    %c0_18 = arith.constant 0 : index
    %24 = vector.load %arg6[%c0_16, %c0_17, %c0_18] : memref<8x32x42xbf16, #tpu.memory_space<vmem>>, vector<1x32x42xbf16>
    %25 = vector.shape_cast %24 : vector<1x32x42xbf16> to vector<32x42xbf16>
    %cst_19 = arith.constant dense<0.000000e+00> : vector<8x42xf32>
    %26 = tpu.matmul %23, %25, %cst_19 {dimension_numbers = #tpu.dot_dimension_numbers<[1], [0], [0], [1], [0, 0, 1, 1], [], []>} : vector<8x32xbf16>, vector<32x42xbf16>, vector<8x42xf32> -> vector<8x42xf32>
    %27 = vector.extract_strided_slice %26 {offsets = [0, 0], sizes = [8, 32], strides = [1, 1]} : vector<8x42xf32> to vector<8x32xf32>
    %28 = arith.addf %9, %26 : vector<8x42xf32>
    %29 = vector.extract_strided_slice %2 {offsets = [8, 0], sizes = [8, 32], strides = [1, 1]} : vector<64x32xf32> to vector<8x32xf32>
    %30 = vector.broadcast %5 : vector<1x32xf32> to vector<8x32xf32>
    %31 = arith.addf %29, %30 : vector<8x32xf32>
    %32 = arith.truncf %16 : vector<8x32xf32> to vector<8x32xbf16>
    %cst_20 = arith.constant dense<0.000000e+00> : vector<8x32xf32>
    %33 = tpu.matmul %32, %3, %cst_20 {dimension_numbers = #tpu.dot_dimension_numbers<[1], [0], [0], [1], [0, 0, 1, 1], [], []>} : vector<8x32xbf16>, vector<32x32xbf16>, vector<8x32xf32> -> vector<8x32xf32>
    %34 = arith.addf %31, %33 : vector<8x32xf32>
    %35 = math.tanh %34 : vector<8x32xf32>
    %36 = arith.truncf %35 : vector<8x32xf32> to vector<8x32xbf16>
    %cst_21 = arith.constant dense<0.000000e+00> : vector<8x32xf32>
    %37 = tpu.matmul %36, %4, %cst_21 {dimension_numbers = #tpu.dot_dimension_numbers<[1], [0], [0], [1], [0, 0, 1, 1], [], []>} : vector<8x32xbf16>, vector<32x32xbf16>, vector<8x32xf32> -> vector<8x32xf32>
    %38 = vector.broadcast %6 : vector<1x32xf32> to vector<8x32xf32>
    %39 = arith.addf %37, %38 : vector<8x32xf32>
    %40 = arith.addf %39, %27 : vector<8x32xf32>
    %41 = math.tanh %40 : vector<8x32xf32>
    %42 = arith.truncf %41 : vector<8x32xf32> to vector<8x32xbf16>
    %c1 = arith.constant 1 : index
    %c0_22 = arith.constant 0 : index
    %c0_23 = arith.constant 0 : index
    %43 = vector.load %arg6[%c1, %c0_22, %c0_23] : memref<8x32x42xbf16, #tpu.memory_space<vmem>>, vector<1x32x42xbf16>
    %44 = vector.shape_cast %43 : vector<1x32x42xbf16> to vector<32x42xbf16>
    %cst_24 = arith.constant dense<0.000000e+00> : vector<8x42xf32>
    %45 = tpu.matmul %42, %44, %cst_24 {dimension_numbers = #tpu.dot_dimension_numbers<[1], [0], [0], [1], [0, 0, 1, 1], [], []>} : vector<8x32xbf16>, vector<32x42xbf16>, vector<8x42xf32> -> vector<8x42xf32>
    %46 = vector.extract_strided_slice %45 {offsets = [0, 0], sizes = [8, 32], strides = [1, 1]} : vector<8x42xf32> to vector<8x32xf32>
    %47 = arith.addf %28, %45 : vector<8x42xf32>
    %48 = vector.extract_strided_slice %2 {offsets = [16, 0], sizes = [8, 32], strides = [1, 1]} : vector<64x32xf32> to vector<8x32xf32>
    %49 = vector.broadcast %5 : vector<1x32xf32> to vector<8x32xf32>
    %50 = arith.addf %48, %49 : vector<8x32xf32>
    %51 = arith.truncf %35 : vector<8x32xf32> to vector<8x32xbf16>
    %cst_25 = arith.constant dense<0.000000e+00> : vector<8x32xf32>
    %52 = tpu.matmul %51, %3, %cst_25 {dimension_numbers = #tpu.dot_dimension_numbers<[1], [0], [0], [1], [0, 0, 1, 1], [], []>} : vector<8x32xbf16>, vector<32x32xbf16>, vector<8x32xf32> -> vector<8x32xf32>
    %53 = arith.addf %50, %52 : vector<8x32xf32>
    %54 = math.tanh %53 : vector<8x32xf32>
    %55 = arith.truncf %54 : vector<8x32xf32> to vector<8x32xbf16>
    %cst_26 = arith.constant dense<0.000000e+00> : vector<8x32xf32>
    %56 = tpu.matmul %55, %4, %cst_26 {dimension_numbers = #tpu.dot_dimension_numbers<[1], [0], [0], [1], [0, 0, 1, 1], [], []>} : vector<8x32xbf16>, vector<32x32xbf16>, vector<8x32xf32> -> vector<8x32xf32>
    %57 = vector.broadcast %6 : vector<1x32xf32> to vector<8x32xf32>
    %58 = arith.addf %56, %57 : vector<8x32xf32>
    %59 = arith.addf %58, %46 : vector<8x32xf32>
    %60 = math.tanh %59 : vector<8x32xf32>
    %61 = arith.truncf %60 : vector<8x32xf32> to vector<8x32xbf16>
    %c2 = arith.constant 2 : index
    %c0_27 = arith.constant 0 : index
    %c0_28 = arith.constant 0 : index
    %62 = vector.load %arg6[%c2, %c0_27, %c0_28] : memref<8x32x42xbf16, #tpu.memory_space<vmem>>, vector<1x32x42xbf16>
    %63 = vector.shape_cast %62 : vector<1x32x42xbf16> to vector<32x42xbf16>
    %cst_29 = arith.constant dense<0.000000e+00> : vector<8x42xf32>
    %64 = tpu.matmul %61, %63, %cst_29 {dimension_numbers = #tpu.dot_dimension_numbers<[1], [0], [0], [1], [0, 0, 1, 1], [], []>} : vector<8x32xbf16>, vector<32x42xbf16>, vector<8x42xf32> -> vector<8x42xf32>
    %65 = vector.extract_strided_slice %64 {offsets = [0, 0], sizes = [8, 32], strides = [1, 1]} : vector<8x42xf32> to vector<8x32xf32>
    %66 = arith.addf %47, %64 : vector<8x42xf32>
    %67 = vector.extract_strided_slice %2 {offsets = [24, 0], sizes = [8, 32], strides = [1, 1]} : vector<64x32xf32> to vector<8x32xf32>
    %68 = vector.broadcast %5 : vector<1x32xf32> to vector<8x32xf32>
    %69 = arith.addf %67, %68 : vector<8x32xf32>
    %70 = arith.truncf %54 : vector<8x32xf32> to vector<8x32xbf16>
    %cst_30 = arith.constant dense<0.000000e+00> : vector<8x32xf32>
    %71 = tpu.matmul %70, %3, %cst_30 {dimension_numbers = #tpu.dot_dimension_numbers<[1], [0], [0], [1], [0, 0, 1, 1], [], []>} : vector<8x32xbf16>, vector<32x32xbf16>, vector<8x32xf32> -> vector<8x32xf32>
    %72 = arith.addf %69, %71 : vector<8x32xf32>
    %73 = math.tanh %72 : vector<8x32xf32>
    %74 = arith.truncf %73 : vector<8x32xf32> to vector<8x32xbf16>
    %cst_31 = arith.constant dense<0.000000e+00> : vector<8x32xf32>
    %75 = tpu.matmul %74, %4, %cst_31 {dimension_numbers = #tpu.dot_dimension_numbers<[1], [0], [0], [1], [0, 0, 1, 1], [], []>} : vector<8x32xbf16>, vector<32x32xbf16>, vector<8x32xf32> -> vector<8x32xf32>
    %76 = vector.broadcast %6 : vector<1x32xf32> to vector<8x32xf32>
    %77 = arith.addf %75, %76 : vector<8x32xf32>
    %78 = arith.addf %77, %65 : vector<8x32xf32>
    %79 = math.tanh %78 : vector<8x32xf32>
    %80 = arith.truncf %79 : vector<8x32xf32> to vector<8x32xbf16>
    %c3 = arith.constant 3 : index
    %c0_32 = arith.constant 0 : index
    %c0_33 = arith.constant 0 : index
    %81 = vector.load %arg6[%c3, %c0_32, %c0_33] : memref<8x32x42xbf16, #tpu.memory_space<vmem>>, vector<1x32x42xbf16>
    %82 = vector.shape_cast %81 : vector<1x32x42xbf16> to vector<32x42xbf16>
    %cst_34 = arith.constant dense<0.000000e+00> : vector<8x42xf32>
    %83 = tpu.matmul %80, %82, %cst_34 {dimension_numbers = #tpu.dot_dimension_numbers<[1], [0], [0], [1], [0, 0, 1, 1], [], []>} : vector<8x32xbf16>, vector<32x42xbf16>, vector<8x42xf32> -> vector<8x42xf32>
    %84 = vector.extract_strided_slice %83 {offsets = [0, 0], sizes = [8, 32], strides = [1, 1]} : vector<8x42xf32> to vector<8x32xf32>
    %85 = arith.addf %66, %83 : vector<8x42xf32>
    %86 = vector.extract_strided_slice %2 {offsets = [32, 0], sizes = [8, 32], strides = [1, 1]} : vector<64x32xf32> to vector<8x32xf32>
    %87 = vector.broadcast %5 : vector<1x32xf32> to vector<8x32xf32>
    %88 = arith.addf %86, %87 : vector<8x32xf32>
    %89 = arith.truncf %73 : vector<8x32xf32> to vector<8x32xbf16>
    %cst_35 = arith.constant dense<0.000000e+00> : vector<8x32xf32>
    %90 = tpu.matmul %89, %3, %cst_35 {dimension_numbers = #tpu.dot_dimension_numbers<[1], [0], [0], [1], [0, 0, 1, 1], [], []>} : vector<8x32xbf16>, vector<32x32xbf16>, vector<8x32xf32> -> vector<8x32xf32>
    %91 = arith.addf %88, %90 : vector<8x32xf32>
    %92 = math.tanh %91 : vector<8x32xf32>
    %93 = arith.truncf %92 : vector<8x32xf32> to vector<8x32xbf16>
    %cst_36 = arith.constant dense<0.000000e+00> : vector<8x32xf32>
    %94 = tpu.matmul %93, %4, %cst_36 {dimension_numbers = #tpu.dot_dimension_numbers<[1], [0], [0], [1], [0, 0, 1, 1], [], []>} : vector<8x32xbf16>, vector<32x32xbf16>, vector<8x32xf32> -> vector<8x32xf32>
    %95 = vector.broadcast %6 : vector<1x32xf32> to vector<8x32xf32>
    %96 = arith.addf %94, %95 : vector<8x32xf32>
    %97 = arith.addf %96, %84 : vector<8x32xf32>
    %98 = math.tanh %97 : vector<8x32xf32>
    %99 = arith.truncf %98 : vector<8x32xf32> to vector<8x32xbf16>
    %c4 = arith.constant 4 : index
    %c0_37 = arith.constant 0 : index
    %c0_38 = arith.constant 0 : index
    %100 = vector.load %arg6[%c4, %c0_37, %c0_38] : memref<8x32x42xbf16, #tpu.memory_space<vmem>>, vector<1x32x42xbf16>
    %101 = vector.shape_cast %100 : vector<1x32x42xbf16> to vector<32x42xbf16>
    %cst_39 = arith.constant dense<0.000000e+00> : vector<8x42xf32>
    %102 = tpu.matmul %99, %101, %cst_39 {dimension_numbers = #tpu.dot_dimension_numbers<[1], [0], [0], [1], [0, 0, 1, 1], [], []>} : vector<8x32xbf16>, vector<32x42xbf16>, vector<8x42xf32> -> vector<8x42xf32>
    %103 = vector.extract_strided_slice %102 {offsets = [0, 0], sizes = [8, 32], strides = [1, 1]} : vector<8x42xf32> to vector<8x32xf32>
    %104 = arith.addf %85, %102 : vector<8x42xf32>
    %105 = vector.extract_strided_slice %2 {offsets = [40, 0], sizes = [8, 32], strides = [1, 1]} : vector<64x32xf32> to vector<8x32xf32>
    %106 = vector.broadcast %5 : vector<1x32xf32> to vector<8x32xf32>
    %107 = arith.addf %105, %106 : vector<8x32xf32>
    %108 = arith.truncf %92 : vector<8x32xf32> to vector<8x32xbf16>
    %cst_40 = arith.constant dense<0.000000e+00> : vector<8x32xf32>
    %109 = tpu.matmul %108, %3, %cst_40 {dimension_numbers = #tpu.dot_dimension_numbers<[1], [0], [0], [1], [0, 0, 1, 1], [], []>} : vector<8x32xbf16>, vector<32x32xbf16>, vector<8x32xf32> -> vector<8x32xf32>
    %110 = arith.addf %107, %109 : vector<8x32xf32>
    %111 = math.tanh %110 : vector<8x32xf32>
    %112 = arith.truncf %111 : vector<8x32xf32> to vector<8x32xbf16>
    %cst_41 = arith.constant dense<0.000000e+00> : vector<8x32xf32>
    %113 = tpu.matmul %112, %4, %cst_41 {dimension_numbers = #tpu.dot_dimension_numbers<[1], [0], [0], [1], [0, 0, 1, 1], [], []>} : vector<8x32xbf16>, vector<32x32xbf16>, vector<8x32xf32> -> vector<8x32xf32>
    %114 = vector.broadcast %6 : vector<1x32xf32> to vector<8x32xf32>
    %115 = arith.addf %113, %114 : vector<8x32xf32>
    %116 = arith.addf %115, %103 : vector<8x32xf32>
    %117 = math.tanh %116 : vector<8x32xf32>
    %118 = arith.truncf %117 : vector<8x32xf32> to vector<8x32xbf16>
    %c5 = arith.constant 5 : index
    %c0_42 = arith.constant 0 : index
    %c0_43 = arith.constant 0 : index
    %119 = vector.load %arg6[%c5, %c0_42, %c0_43] : memref<8x32x42xbf16, #tpu.memory_space<vmem>>, vector<1x32x42xbf16>
    %120 = vector.shape_cast %119 : vector<1x32x42xbf16> to vector<32x42xbf16>
    %cst_44 = arith.constant dense<0.000000e+00> : vector<8x42xf32>
    %121 = tpu.matmul %118, %120, %cst_44 {dimension_numbers = #tpu.dot_dimension_numbers<[1], [0], [0], [1], [0, 0, 1, 1], [], []>} : vector<8x32xbf16>, vector<32x42xbf16>, vector<8x42xf32> -> vector<8x42xf32>
    %122 = vector.extract_strided_slice %121 {offsets = [0, 0], sizes = [8, 32], strides = [1, 1]} : vector<8x42xf32> to vector<8x32xf32>
    %123 = arith.addf %104, %121 : vector<8x42xf32>
    %124 = vector.extract_strided_slice %2 {offsets = [48, 0], sizes = [8, 32], strides = [1, 1]} : vector<64x32xf32> to vector<8x32xf32>
    %125 = vector.broadcast %5 : vector<1x32xf32> to vector<8x32xf32>
    %126 = arith.addf %124, %125 : vector<8x32xf32>
    %127 = arith.truncf %111 : vector<8x32xf32> to vector<8x32xbf16>
    %cst_45 = arith.constant dense<0.000000e+00> : vector<8x32xf32>
    %128 = tpu.matmul %127, %3, %cst_45 {dimension_numbers = #tpu.dot_dimension_numbers<[1], [0], [0], [1], [0, 0, 1, 1], [], []>} : vector<8x32xbf16>, vector<32x32xbf16>, vector<8x32xf32> -> vector<8x32xf32>
    %129 = arith.addf %126, %128 : vector<8x32xf32>
    %130 = math.tanh %129 : vector<8x32xf32>
    %131 = arith.truncf %130 : vector<8x32xf32> to vector<8x32xbf16>
    %cst_46 = arith.constant dense<0.000000e+00> : vector<8x32xf32>
    %132 = tpu.matmul %131, %4, %cst_46 {dimension_numbers = #tpu.dot_dimension_numbers<[1], [0], [0], [1], [0, 0, 1, 1], [], []>} : vector<8x32xbf16>, vector<32x32xbf16>, vector<8x32xf32> -> vector<8x32xf32>
    %133 = vector.broadcast %6 : vector<1x32xf32> to vector<8x32xf32>
    %134 = arith.addf %132, %133 : vector<8x32xf32>
    %135 = arith.addf %134, %122 : vector<8x32xf32>
    %136 = math.tanh %135 : vector<8x32xf32>
    %137 = arith.truncf %136 : vector<8x32xf32> to vector<8x32xbf16>
    %c6 = arith.constant 6 : index
    %c0_47 = arith.constant 0 : index
    %c0_48 = arith.constant 0 : index
    %138 = vector.load %arg6[%c6, %c0_47, %c0_48] : memref<8x32x42xbf16, #tpu.memory_space<vmem>>, vector<1x32x42xbf16>
    %139 = vector.shape_cast %138 : vector<1x32x42xbf16> to vector<32x42xbf16>
    %cst_49 = arith.constant dense<0.000000e+00> : vector<8x42xf32>
    %140 = tpu.matmul %137, %139, %cst_49 {dimension_numbers = #tpu.dot_dimension_numbers<[1], [0], [0], [1], [0, 0, 1, 1], [], []>} : vector<8x32xbf16>, vector<32x42xbf16>, vector<8x42xf32> -> vector<8x42xf32>
    %141 = vector.extract_strided_slice %140 {offsets = [0, 0], sizes = [8, 32], strides = [1, 1]} : vector<8x42xf32> to vector<8x32xf32>
    %142 = arith.addf %123, %140 : vector<8x42xf32>
    %143 = vector.extract_strided_slice %2 {offsets = [56, 0], sizes = [8, 32], strides = [1, 1]} : vector<64x32xf32> to vector<8x32xf32>
    %144 = vector.broadcast %5 : vector<1x32xf32> to vector<8x32xf32>
    %145 = arith.addf %143, %144 : vector<8x32xf32>
    %146 = arith.truncf %130 : vector<8x32xf32> to vector<8x32xbf16>
    %cst_50 = arith.constant dense<0.000000e+00> : vector<8x32xf32>
    %147 = tpu.matmul %146, %3, %cst_50 {dimension_numbers = #tpu.dot_dimension_numbers<[1], [0], [0], [1], [0, 0, 1, 1], [], []>} : vector<8x32xbf16>, vector<32x32xbf16>, vector<8x32xf32> -> vector<8x32xf32>
    %148 = arith.addf %145, %147 : vector<8x32xf32>
    %149 = math.tanh %148 : vector<8x32xf32>
    %150 = arith.truncf %149 : vector<8x32xf32> to vector<8x32xbf16>
    %cst_51 = arith.constant dense<0.000000e+00> : vector<8x32xf32>
    %151 = tpu.matmul %150, %4, %cst_51 {dimension_numbers = #tpu.dot_dimension_numbers<[1], [0], [0], [1], [0, 0, 1, 1], [], []>} : vector<8x32xbf16>, vector<32x32xbf16>, vector<8x32xf32> -> vector<8x32xf32>
    %152 = vector.broadcast %6 : vector<1x32xf32> to vector<8x32xf32>
    %153 = arith.addf %151, %152 : vector<8x32xf32>
    %154 = arith.addf %153, %141 : vector<8x32xf32>
    %155 = math.tanh %154 : vector<8x32xf32>
    %156 = arith.truncf %155 : vector<8x32xf32> to vector<8x32xbf16>
    %c7 = arith.constant 7 : index
    %c0_52 = arith.constant 0 : index
    %c0_53 = arith.constant 0 : index
    %157 = vector.load %arg6[%c7, %c0_52, %c0_53] : memref<8x32x42xbf16, #tpu.memory_space<vmem>>, vector<1x32x42xbf16>
    %158 = vector.shape_cast %157 : vector<1x32x42xbf16> to vector<32x42xbf16>
    %cst_54 = arith.constant dense<0.000000e+00> : vector<8x42xf32>
    %159 = tpu.matmul %156, %158, %cst_54 {dimension_numbers = #tpu.dot_dimension_numbers<[1], [0], [0], [1], [0, 0, 1, 1], [], []>} : vector<8x32xbf16>, vector<32x42xbf16>, vector<8x42xf32> -> vector<8x42xf32>
    %160 = arith.addf %142, %159 : vector<8x42xf32>
    %161 = vector.extract_strided_slice %160 {offsets = [0, 32], sizes = [8, 10], strides = [1, 1]} : vector<8x42xf32> to vector<8x10xf32>
    %c0_55 = arith.constant 0 : index
    %c0_56 = arith.constant 0 : index
    %162 = vector.load %arg7[%c0_55, %c0_56] : memref<1x10xf32, #tpu.memory_space<vmem>>, vector<1x10xf32>
    %163 = vector.broadcast %162 : vector<1x10xf32> to vector<8x10xf32>
    %164 = arith.addf %161, %163 : vector<8x10xf32>
    %c0_57 = arith.constant 0 : index
    %c0_58 = arith.constant 0 : index
    %165 = vector.load %arg8[%c0_57, %c0_58] : memref<8x10xf32, #tpu.memory_space<vmem>>, vector<8x10xf32>
    tpu.vector_store %arg8[%c0_57, %c0_58], %164 {strides = array<i32>} : memref<8x10xf32, #tpu.memory_space<vmem>>, vector<8x10xf32>,
    return
  }
}

</mosaic_0001>

<llo_original>
// kernel: rnn_forward.1
$region0: #{rnn_forward.1}
  #allocation0 [shape = 'u32[]', space=smem, size = 0x4, offset = 0x4, fixed_abs, tag = 'smem constant byte address 0x4 - core index']
  #allocation1 [shape = 'u32[72,128]{1,0:T(1,128)}', space=vmem, size = 0x9000, scoped, tag = 'internal scratch']
  %s0 = inlined_call_operand.vmem [shape: bf16[64,28], index: 0, kind: input, shape index: {}]
  %s1 = inlined_call_operand.vmem [shape: bf16[28,32], index: 1, kind: input, shape index: {}]
  %s2 = inlined_call_operand.vmem [shape: bf16[32,32], index: 2, kind: input, shape index: {}]
  %s3 = inlined_call_operand.vmem [shape: f32[1,32], index: 3, kind: input, shape index: {}]
  %s4 = inlined_call_operand.vmem [shape: bf16[32,32], index: 4, kind: input, shape index: {}]
  %s5 = inlined_call_operand.vmem [shape: f32[1,32], index: 5, kind: input, shape index: {}]
  %s6 = inlined_call_operand.vmem [shape: bf16[8,32,42], index: 6, kind: input, shape index: {}]
  %s7 = inlined_call_operand.vmem [shape: f32[1,10], index: 7, kind: input, shape index: {}]
  %s8 = inlined_call_operand.vmem [shape: f32[8,10], index: 8, kind: output, shape index: {}]
  %s9 = sld [smem:[#allocation0]]
  $region42: #{rnn_forward.1} parent=0
    _
  %s11 = ssub.s32 1, %s9
  %s12 = scalar_select 0, %s11, %s9
  // Predicated region
  $region2: #{rnn_forward.1} parent=0 // pred_check
    _
  $region3: #{rnn_forward.1} parent=0 // pred_check_branch
    %14 = sbr.rel (0) target = $region5
  $region4: #{rnn_forward.1} parent=0 // pred_region
    _
  $region5: #{rnn_forward.1} parent=0 // pred_fallthru
    _
  // Predicated region
  $region6: #{rnn_forward.1} parent=0 // pred_check
    _
  $region7: #{rnn_forward.1} parent=0 // pred_check_branch
    %16 = sbr.rel (0) target = $region9
  $region8: #{rnn_forward.1} parent=0 // pred_region
    _
  $region9: #{rnn_forward.1} parent=0 // pred_fallthru
    _
  // Predicated region
  $region10: #{rnn_forward.1} parent=0 // pred_check
    _
  $region11: #{rnn_forward.1} parent=0 // pred_check_branch
    %18 = sbr.rel (0) target = $region13
  $region12: #{rnn_forward.1} parent=0 // pred_region
    _
  $region13: #{rnn_forward.1} parent=0 // pred_fallthru
    _
  // Predicated region
  $region14: #{rnn_forward.1} parent=0 // pred_check
    _
  $region15: #{rnn_forward.1} parent=0 // pred_check_branch
    %20 = sbr.rel (0) target = $region17
  $region16: #{rnn_forward.1} parent=0 // pred_region
    _
  $region17: #{rnn_forward.1} parent=0 // pred_fallthru
    _
  // Predicated region
  $region18: #{rnn_forward.1} parent=0 // pred_check
    _
  $region19: #{rnn_forward.1} parent=0 // pred_check_branch
    %22 = sbr.rel (0) target = $region21
  $region20: #{rnn_forward.1} parent=0 // pred_region
    _
  $region21: #{rnn_forward.1} parent=0 // pred_fallthru
    _
  // Predicated region
  $region22: #{rnn_forward.1} parent=0 // pred_check
    _
  $region23: #{rnn_forward.1} parent=0 // pred_check_branch
    %24 = sbr.rel (0) target = $region25
  $region24: #{rnn_forward.1} parent=0 // pred_region
    _
  $region25: #{rnn_forward.1} parent=0 // pred_fallthru
    _
  // Predicated region
  $region26: #{rnn_forward.1} parent=0 // pred_check
    _
  $region27: #{rnn_forward.1} parent=0 // pred_check_branch
    %26 = sbr.rel (0) target = $region29
  $region28: #{rnn_forward.1} parent=0 // pred_region
    _
  $region29: #{rnn_forward.1} parent=0 // pred_fallthru
    _
  // Predicated region
  $region30: #{rnn_forward.1} parent=0 // pred_check
    _
  $region31: #{rnn_forward.1} parent=0 // pred_check_branch
    %28 = sbr.rel (0) target = $region33
  $region32: #{rnn_forward.1} parent=0 // pred_region
    _
  $region33: #{rnn_forward.1} parent=0 // pred_fallthru
    _
  %v30 = vld [vmem:[%s0] sm:$0xf]
  %v31 = vld [vmem:[%s0 + $0x4] sm:$0xf]
  %v32 = vld [vmem:[%s0 + $0x8] sm:$0xf]
  %v33 = vld [vmem:[%s0 + $0xc] sm:$0xf]
  %v34 = vld [vmem:[%s0 + $0x10] sm:$0xf]
  %v35 = vld [vmem:[%s0 + $0x14] sm:$0xf]
  %v36 = vld [vmem:[%s0 + $0x18] sm:$0xf]
  %v37 = vld [vmem:[%s0 + $0x1c] sm:$0xf]
  %v38 = vld [vmem:[%s1] sm:$0xf]
  %v39 = vld [vmem:[%s1 + $0x4] sm:$0xf]
  %v40 = vld [vmem:[%s1 + $0x8] sm:$0xf]
  %v41 = vld [vmem:[%s1 + $0xc] sm:$0x3]
  %v50 = vunpack.c.l.b16 %v30
  %v51 = vunpack.c.l.b16 %v31
  %v52 = vunpack.c.l.b16 %v32
  %v53 = vunpack.c.l.b16 %v33
  %v54 = vunpack.c.l.b16 %v34
  %v55 = vunpack.c.l.b16 %v35
  %v56 = vunpack.c.l.b16 %v36
  %v57 = vunpack.c.l.b16 %v37
  %v58 = vpack.c.b16 %v51, %v50
  %v59 = vpack.c.b16 %v53, %v52
  %v60 = vpack.c.b16 %v55, %v54
  %v61 = vpack.c.b16 %v57, %v56
  %v66 = vunpack.c.l.b16 %v38
  %v67 = vunpack.c.l.b16 %v39
  %v68 = vunpack.c.l.b16 %v40
  %v69 = vunpack.c.l.b16 %v41
  %v70 = vpack.c.b16 %v67, %v66
  %v71 = vpack.c.b16 %v69, %v68
  %vm73 = vcmask 228352
  %v75 = vsel %vm73, %v58, 0
  %v78 = vsel %vm73, %v59, 0
  %v81 = vsel %vm73, %v60, 0
  %v84 = vsel %vm73, %v61, 0
  %vm86 = vcmask 1045504
  %v88 = vsel %vm86, %v71, 0
  %90 = vmatpush.bf16.msra.mxu0 0
  %91 = vmatpush.bf16.msra.mxu0 0
  %92 = vmatpush.bf16.msra.mxu0 0
  %93 = vmatpush.bf16.msra.mxu0 0
  %94 = vmatpush.bf16.msra.mxu0 0
  %95 = vmatpush.bf16.msra.mxu0 0
  %96 = vmatpush.bf16.msra.mxu0 %v88
  %97 = vmatpush.bf16.msra.mxu0 %v70
  %98 = vmatmul.bf16.gmra.mxu0 %v75
  %v99 = vpop.f32.mrf.mxu0
  %v100 = vadd.f32 0.0, %v99
  %v101 = vpop.f32.mrf.mxu0
  %v102 = vadd.f32 0.0, %v101
  %103 = vmatmul.bf16.gmra.mxu0 %v78
  %v104 = vpop.f32.mrf.mxu0
  %v105 = vadd.f32 0.0, %v104
  %v106 = vpop.f32.mrf.mxu0
  %v107 = vadd.f32 0.0, %v106
  %108 = vmatmul.bf16.gmra.mxu0 %v81
  %v109 = vpop.f32.mrf.mxu0
  %v110 = vadd.f32 0.0, %v109
  %v111 = vpop.f32.mrf.mxu0
  %v112 = vadd.f32 0.0, %v111
  %113 = vmatmul.bf16.gmra.mxu0 %v84
  %v114 = vpop.f32.mrf.mxu0
  %v115 = vadd.f32 0.0, %v114
  %v116 = vpop.f32.mrf.mxu0
  %v117 = vadd.f32 0.0, %v116
  %118 = vdwg.mxu0
  %v119 = vld [vmem:[%s2] sm:$0xf]
  %v120 = vld [vmem:[%s2 + $0x4] sm:$0xf]
  %v121 = vld [vmem:[%s2 + $0x8] sm:$0xf]
  %v122 = vld [vmem:[%s2 + $0xc] sm:$0xf]
  %v123 = vld [vmem:[%s4] sm:$0xf]
  %v124 = vld [vmem:[%s4 + $0x4] sm:$0xf]
  %v125 = vld [vmem:[%s4 + $0x8] sm:$0xf]
  %v126 = vld [vmem:[%s4 + $0xc] sm:$0xf]
  %v127 = vld [vmem:[%s3] sm:$0x1]
  %v128 = vld [vmem:[%s5] sm:$0x1]
  %v130 = vperm.slane %v127, 0
  %v132 = vadd.f32 %v100, %v130
  %v137 = vunpack.c.l.b16 %v119
  %v138 = vunpack.c.l.b16 %v120
  %v139 = vunpack.c.l.b16 %v121
  %v140 = vunpack.c.l.b16 %v122
  %v141 = vpack.c.b16 %v138, %v137
  %v142 = vpack.c.b16 %v140, %v139
  %vm145 = vcmask 261120
  %v147 = vsel %vm145, 0, 0
  %149 = vmatpush.bf16.msra.mxu0 0
  %150 = vmatpush.bf16.msra.mxu0 0
  %151 = vmatpush.bf16.msra.mxu0 0
  %152 = vmatpush.bf16.msra.mxu0 0
  %153 = vmatpush.bf16.msra.mxu0 0
  %154 = vmatpush.bf16.msra.mxu0 0
  %155 = vmatpush.bf16.msra.mxu0 %v142
  %156 = vmatpush.bf16.msra.mxu0 %v141
  %157 = vmatmul.bf16.gmra.mxu0 %v147
  %v158 = vpop.f32.mrf.mxu0
  %v159 = vadd.f32 0.0, %v158
  %v160 = vpop.f32.mrf.mxu0
  %161 = vdwg.mxu0
  %v162 = vadd.f32 %v132, %v159
  %v163 = vtanh.pop %v162
  %v164 = vpack.c.bf16 %v163, %v163
  %v166 = vperm.slane %v128, 0
  %v172 = vunpack.c.l.b16 %v123
  %v173 = vunpack.c.l.b16 %v124
  %v174 = vunpack.c.l.b16 %v125
  %v175 = vunpack.c.l.b16 %v126
  %v176 = vpack.c.b16 %v173, %v172
  %v177 = vpack.c.b16 %v175, %v174
  %v181 = vsel %vm145, %v164, 0
  %183 = vmatpush.bf16.msra.mxu0 0
  %184 = vmatpush.bf16.msra.mxu0 0
  %185 = vmatpush.bf16.msra.mxu0 0
  %186 = vmatpush.bf16.msra.mxu0 0
  %187 = vmatpush.bf16.msra.mxu0 0
  %188 = vmatpush.bf16.msra.mxu0 0
  %189 = vmatpush.bf16.msra.mxu0 %v177
  %190 = vmatpush.bf16.msra.mxu0 %v176
  %191 = vmatmul.bf16.gmra.mxu0 %v181
  %v192 = vpop.f32.mrf.mxu0
  %v193 = vadd.f32 %v166, %v192
  %v194 = vpop.f32.mrf.mxu0
  %195 = vdwg.mxu0
  %v196 = vadd.f32 %v193, 0.0
  %v197 = vtanh.pop %v196
  %v198 = vpack.c.bf16 %v197, %v197
  %v199 = vld [vmem:[%s6] sm:$0xf]
  %v200 = vld [vmem:[%s6 + $0x4] sm:$0xf]
  %v201 = vld [vmem:[%s6 + $0x8] sm:$0xf]
  %v202 = vld [vmem:[%s6 + $0xc] sm:$0xf]
  %v207 = vunpack.c.l.b16 %v199
  %v208 = vunpack.c.l.b16 %v200
  %v209 = vunpack.c.l.b16 %v201
  %v210 = vunpack.c.l.b16 %v202
  %v211 = vpack.c.b16 %v208, %v207
  %v212 = vpack.c.b16 %v210, %v209
  %v216 = vsel %vm145, %v198, 0
  %218 = vmatpush.bf16.msra.mxu0 0
  %219 = vmatpush.bf16.msra.mxu0 0
  %220 = vmatpush.bf16.msra.mxu0 0
  %221 = vmatpush.bf16.msra.mxu0 0
  %222 = vmatpush.bf16.msra.mxu0 0
  %223 = vmatpush.bf16.msra.mxu0 0
  %224 = vmatpush.bf16.msra.mxu0 %v212
  %225 = vmatpush.bf16.msra.mxu0 %v211
  %226 = vmatmul.bf16.gmra.mxu0 %v216
  %v227 = vpop.f32.mrf.mxu0
  %v228 = vadd.f32 0.0, %v227
  %v229 = vpop.f32.mrf.mxu0
  %230 = vdwg.mxu0
  %v231 = vadd.f32 %v228, 0.0
  %v232 = vadd.f32 %v102, %v130
  %233 = vmatpush.bf16.msra.mxu0 0
  %234 = vmatpush.bf16.msra.mxu0 0
  %235 = vmatpush.bf16.msra.mxu0 0
  %236 = vmatpush.bf16.msra.mxu0 0
  %237 = vmatpush.bf16.msra.mxu0 0
  %238 = vmatpush.bf16.msra.mxu0 0
  %239 = vmatpush.bf16.msra.mxu0 %v142
  %240 = vmatpush.bf16.msra.mxu0 %v141
  %241 = vmatmul.bf16.gmra.mxu0 %v181
  %v242 = vpop.f32.mrf.mxu0
  %v243 = vadd.f32 0.0, %v242
  %v244 = vpop.f32.mrf.mxu0
  %245 = vdwg.mxu0
  %v246 = vadd.f32 %v232, %v243
  %v247 = vtanh.pop %v246
  %v248 = vpack.c.bf16 %v247, %v247
  %v250 = vsel %vm145, %v248, 0
  %252 = vmatpush.bf16.msra.mxu0 0
  %253 = vmatpush.bf16.msra.mxu0 0
  %254 = vmatpush.bf16.msra.mxu0 0
  %255 = vmatpush.bf16.msra.mxu0 0
  %256 = vmatpush.bf16.msra.mxu0 0
  %257 = vmatpush.bf16.msra.mxu0 0
  %258 = vmatpush.bf16.msra.mxu0 %v177
  %259 = vmatpush.bf16.msra.mxu0 %v176
  %260 = vmatmul.bf16.gmra.mxu0 %v250
  %v261 = vpop.f32.mrf.mxu0
  %v262 = vadd.f32 %v166, %v261
  %v263 = vpop.f32.mrf.mxu0
  %264 = vdwg.mxu0
  %v265 = vadd.f32 %v262, %v228
  %v266 = vtanh.pop %v265
  %v267 = vpack.c.bf16 %v266, %v266
  %s268 = scalar_lea.vmem %s6, 16
  %v269 = vld [vmem:[%s268] sm:$0xf]
  %v270 = vld [vmem:[%s268 + $0x4] sm:$0xf]
  %v271 = vld [vmem:[%s268 + $0x8] sm:$0xf]
  %v272 = vld [vmem:[%s268 + $0xc] sm:$0xf]
  %v277 = vunpack.c.l.b16 %v269
  %v278 = vunpack.c.l.b16 %v270
  %v279 = vunpack.c.l.b16 %v271
  %v280 = vunpack.c.l.b16 %v272
  %v281 = vpack.c.b16 %v278, %v277
  %v282 = vpack.c.b16 %v280, %v279
  %v286 = vsel %vm145, %v267, 0
  %288 = vmatpush.bf16.msra.mxu0 0
  %289 = vmatpush.bf16.msra.mxu0 0
  %290 = vmatpush.bf16.msra.mxu0 0
  %291 = vmatpush.bf16.msra.mxu0 0
  %292 = vmatpush.bf16.msra.mxu0 0
  %293 = vmatpush.bf16.msra.mxu0 0
  %294 = vmatpush.bf16.msra.mxu0 %v282
  %295 = vmatpush.bf16.msra.mxu0 %v281
  %296 = vmatmul.bf16.gmra.mxu0 %v286
  %v297 = vpop.f32.mrf.mxu0
  %v298 = vadd.f32 0.0, %v297
  %v299 = vpop.f32.mrf.mxu0
  %300 = vdwg.mxu0
  %v301 = vadd.f32 %v231, %v298
  %v302 = vadd.f32 %v105, %v130
  %303 = vmatpush.bf16.msra.mxu0 0
  %304 = vmatpush.bf16.msra.mxu0 0
  %305 = vmatpush.bf16.msra.mxu0 0
  %306 = vmatpush.bf16.msra.mxu0 0
  %307 = vmatpush.bf16.msra.mxu0 0
  %308 = vmatpush.bf16.msra.mxu0 0
  %309 = vmatpush.bf16.msra.mxu0 %v142
  %310 = vmatpush.bf16.msra.mxu0 %v141
  %311 = vmatmul.bf16.gmra.mxu0 %v250
  %v312 = vpop.f32.mrf.mxu0
  %v313 = vadd.f32 0.0, %v312
  %v314 = vpop.f32.mrf.mxu0
  %315 = vdwg.mxu0
  %v316 = vadd.f32 %v302, %v313
  %v317 = vtanh.pop %v316
  %v318 = vpack.c.bf16 %v317, %v317
  %v320 = vsel %vm145, %v318, 0
  %322 = vmatpush.bf16.msra.mxu0 0
  %323 = vmatpush.bf16.msra.mxu0 0
  %324 = vmatpush.bf16.msra.mxu0 0
  %325 = vmatpush.bf16.msra.mxu0 0
  %326 = vmatpush.bf16.msra.mxu0 0
  %327 = vmatpush.bf16.msra.mxu0 0
  %328 = vmatpush.bf16.msra.mxu0 %v177
  %329 = vmatpush.bf16.msra.mxu0 %v176
  %330 = vmatmul.bf16.gmra.mxu0 %v320
  %v331 = vpop.f32.mrf.mxu0
  %v332 = vadd.f32 %v166, %v331
  %v333 = vpop.f32.mrf.mxu0
  %334 = vdwg.mxu0
  %v335 = vadd.f32 %v332, %v298
  %v336 = vtanh.pop %v335
  %v337 = vpack.c.bf16 %v336, %v336
  %s338 = scalar_lea.vmem %s6, 32
  %v339 = vld [vmem:[%s338] sm:$0xf]
  %v340 = vld [vmem:[%s338 + $0x4] sm:$0xf]
  %v341 = vld [vmem:[%s338 + $0x8] sm:$0xf]
  %v342 = vld [vmem:[%s338 + $0xc] sm:$0xf]
  %v347 = vunpack.c.l.b16 %v339
  %v348 = vunpack.c.l.b16 %v340
  %v349 = vunpack.c.l.b16 %v341
  %v350 = vunpack.c.l.b16 %v342
  %v351 = vpack.c.b16 %v348, %v347
  %v352 = vpack.c.b16 %v350, %v349
  %v356 = vsel %vm145, %v337, 0
  %358 = vmatpush.bf16.msra.mxu0 0
  %359 = vmatpush.bf16.msra.mxu0 0
  %360 = vmatpush.bf16.msra.mxu0 0
  %361 = vmatpush.bf16.msra.mxu0 0
  %362 = vmatpush.bf16.msra.mxu0 0
  %363 = vmatpush.bf16.msra.mxu0 0
  %364 = vmatpush.bf16.msra.mxu0 %v352
  %365 = vmatpush.bf16.msra.mxu0 %v351
  %366 = vmatmul.bf16.gmra.mxu0 %v356
  %v367 = vpop.f32.mrf.mxu0
  %v368 = vadd.f32 0.0, %v367
  %v369 = vpop.f32.mrf.mxu0
  %370 = vdwg.mxu0
  %v371 = vadd.f32 %v301, %v368
  %v372 = vadd.f32 %v107, %v130
  %373 = vmatpush.bf16.msra.mxu0 0
  %374 = vmatpush.bf16.msra.mxu0 0
  %375 = vmatpush.bf16.msra.mxu0 0
  %376 = vmatpush.bf16.msra.mxu0 0
  %377 = vmatpush.bf16.msra.mxu0 0
  %378 = vmatpush.bf16.msra.mxu0 0
  %379 = vmatpush.bf16.msra.mxu0 %v142
  %380 = vmatpush.bf16.msra.mxu0 %v141
  %381 = vmatmul.bf16.gmra.mxu0 %v320
  %v382 = vpop.f32.mrf.mxu0
  %v383 = vadd.f32 0.0, %v382
  %v384 = vpop.f32.mrf.mxu0
  %385 = vdwg.mxu0
  %v386 = vadd.f32 %v372, %v383
  %v387 = vtanh.pop %v386
  %v388 = vpack.c.bf16 %v387, %v387
  %v390 = vsel %vm145, %v388, 0
  %392 = vmatpush.bf16.msra.mxu0 0
  %393 = vmatpush.bf16.msra.mxu0 0
  %394 = vmatpush.bf16.msra.mxu0 0
  %395 = vmatpush.bf16.msra.mxu0 0
  %396 = vmatpush.bf16.msra.mxu0 0
  %397 = vmatpush.bf16.msra.mxu0 0
  %398 = vmatpush.bf16.msra.mxu0 %v177
  %399 = vmatpush.bf16.msra.mxu0 %v176
  %400 = vmatmul.bf16.gmra.mxu0 %v390
  %v401 = vpop.f32.mrf.mxu0
  %v402 = vadd.f32 %v166, %v401
  %v403 = vpop.f32.mrf.mxu0
  %404 = vdwg.mxu0
  %v405 = vadd.f32 %v402, %v368
  %v406 = vtanh.pop %v405
  %v407 = vpack.c.bf16 %v406, %v406
  %s408 = scalar_lea.vmem %s6, 48
  %v409 = vld [vmem:[%s408] sm:$0xf]
  %v410 = vld [vmem:[%s408 + $0x4] sm:$0xf]
  %v411 = vld [vmem:[%s408 + $0x8] sm:$0xf]
  %v412 = vld [vmem:[%s408 + $0xc] sm:$0xf]
  %v417 = vunpack.c.l.b16 %v409
  %v418 = vunpack.c.l.b16 %v410
  %v419 = vunpack.c.l.b16 %v411
  %v420 = vunpack.c.l.b16 %v412
  %v421 = vpack.c.b16 %v418, %v417
  %v422 = vpack.c.b16 %v420, %v419
  %v426 = vsel %vm145, %v407, 0
  %428 = vmatpush.bf16.msra.mxu0 0
  %429 = vmatpush.bf16.msra.mxu0 0
  %430 = vmatpush.bf16.msra.mxu0 0
  %431 = vmatpush.bf16.msra.mxu0 0
  %432 = vmatpush.bf16.msra.mxu0 0
  %433 = vmatpush.bf16.msra.mxu0 0
  %434 = vmatpush.bf16.msra.mxu0 %v422
  %435 = vmatpush.bf16.msra.mxu0 %v421
  %436 = vmatmul.bf16.gmra.mxu0 %v426
  %v437 = vpop.f32.mrf.mxu0
  %v438 = vadd.f32 0.0, %v437
  %v439 = vpop.f32.mrf.mxu0
  %440 = vdwg.mxu0
  %v441 = vadd.f32 %v371, %v438
  %v442 = vadd.f32 %v110, %v130
  %443 = vmatpush.bf16.msra.mxu0 0
  %444 = vmatpush.bf16.msra.mxu0 0
  %445 = vmatpush.bf16.msra.mxu0 0
  %446 = vmatpush.bf16.msra.mxu0 0
  %447 = vmatpush.bf16.msra.mxu0 0
  %448 = vmatpush.bf16.msra.mxu0 0
  %449 = vmatpush.bf16.msra.mxu0 %v142
  %450 = vmatpush.bf16.msra.mxu0 %v141
  %451 = vmatmul.bf16.gmra.mxu0 %v390
  %v452 = vpop.f32.mrf.mxu0
  %v453 = vadd.f32 0.0, %v452
  %v454 = vpop.f32.mrf.mxu0
  %455 = vdwg.mxu0
  %v456 = vadd.f32 %v442, %v453
  %v457 = vtanh.pop %v456
  %v458 = vpack.c.bf16 %v457, %v457
  %v460 = vsel %vm145, %v458, 0
  %462 = vmatpush.bf16.msra.mxu0 0
  %463 = vmatpush.bf16.msra.mxu0 0
  %464 = vmatpush.bf16.msra.mxu0 0
  %465 = vmatpush.bf16.msra.mxu0 0
  %466 = vmatpush.bf16.msra.mxu0 0
  %467 = vmatpush.bf16.msra.mxu0 0
  %468 = vmatpush.bf16.msra.mxu0 %v177
  %469 = vmatpush.bf16.msra.mxu0 %v176
  %470 = vmatmul.bf16.gmra.mxu0 %v460
  %v471 = vpop.f32.mrf.mxu0
  %v472 = vadd.f32 %v166, %v471
  %v473 = vpop.f32.mrf.mxu0
  %474 = vdwg.mxu0
  %v475 = vadd.f32 %v472, %v438
  %v476 = vtanh.pop %v475
  %v477 = vpack.c.bf16 %v476, %v476
  %s478 = scalar_lea.vmem %s6, 64
  %v479 = vld [vmem:[%s478] sm:$0xf]
  %v480 = vld [vmem:[%s478 + $0x4] sm:$0xf]
  %v481 = vld [vmem:[%s478 + $0x8] sm:$0xf]
  %v482 = vld [vmem:[%s478 + $0xc] sm:$0xf]
  %v487 = vunpack.c.l.b16 %v479
  %v488 = vunpack.c.l.b16 %v480
  %v489 = vunpack.c.l.b16 %v481
  %v490 = vunpack.c.l.b16 %v482
  %v491 = vpack.c.b16 %v488, %v487
  %v492 = vpack.c.b16 %v490, %v489
  %v496 = vsel %vm145, %v477, 0
  %498 = vmatpush.bf16.msra.mxu0 0
  %499 = vmatpush.bf16.msra.mxu0 0
  %500 = vmatpush.bf16.msra.mxu0 0
  %501 = vmatpush.bf16.msra.mxu0 0
  %502 = vmatpush.bf16.msra.mxu0 0
  %503 = vmatpush.bf16.msra.mxu0 0
  %504 = vmatpush.bf16.msra.mxu0 %v492
  %505 = vmatpush.bf16.msra.mxu0 %v491
  %506 = vmatmul.bf16.gmra.mxu0 %v496
  %v507 = vpop.f32.mrf.mxu0
  %v508 = vadd.f32 0.0, %v507
  %v509 = vpop.f32.mrf.mxu0
  %510 = vdwg.mxu0
  %v511 = vadd.f32 %v441, %v508
  %v512 = vadd.f32 %v112, %v130
  %513 = vmatpush.bf16.msra.mxu0 0
  %514 = vmatpush.bf16.msra.mxu0 0
  %515 = vmatpush.bf16.msra.mxu0 0
  %516 = vmatpush.bf16.msra.mxu0 0
  %517 = vmatpush.bf16.msra.mxu0 0
  %518 = vmatpush.bf16.msra.mxu0 0
  %519 = vmatpush.bf16.msra.mxu0 %v142
  %520 = vmatpush.bf16.msra.mxu0 %v141
  %521 = vmatmul.bf16.gmra.mxu0 %v460
  %v522 = vpop.f32.mrf.mxu0
  %v523 = vadd.f32 0.0, %v522
  %v524 = vpop.f32.mrf.mxu0
  %525 = vdwg.mxu0
  %v526 = vadd.f32 %v512, %v523
  %v527 = vtanh.pop %v526
  %v528 = vpack.c.bf16 %v527, %v527
  %v530 = vsel %vm145, %v528, 0
  %532 = vmatpush.bf16.msra.mxu0 0
  %533 = vmatpush.bf16.msra.mxu0 0
  %534 = vmatpush.bf16.msra.mxu0 0
  %535 = vmatpush.bf16.msra.mxu0 0
  %536 = vmatpush.bf16.msra.mxu0 0
  %537 = vmatpush.bf16.msra.mxu0 0
  %538 = vmatpush.bf16.msra.mxu0 %v177
  %539 = vmatpush.bf16.msra.mxu0 %v176
  %540 = vmatmul.bf16.gmra.mxu0 %v530
  %v541 = vpop.f32.mrf.mxu0
  %v542 = vadd.f32 %v166, %v541
  %v543 = vpop.f32.mrf.mxu0
  %544 = vdwg.mxu0
  %v545 = vadd.f32 %v542, %v508
  %v546 = vtanh.pop %v545
  %v547 = vpack.c.bf16 %v546, %v546
  %s548 = scalar_lea.vmem %s6, 80
  %v549 = vld [vmem:[%s548] sm:$0xf]
  %v550 = vld [vmem:[%s548 + $0x4] sm:$0xf]
  %v551 = vld [vmem:[%s548 + $0x8] sm:$0xf]
  %v552 = vld [vmem:[%s548 + $0xc] sm:$0xf]
  %v557 = vunpack.c.l.b16 %v549
  %v558 = vunpack.c.l.b16 %v550
  %v559 = vunpack.c.l.b16 %v551
  %v560 = vunpack.c.l.b16 %v552
  %v561 = vpack.c.b16 %v558, %v557
  %v562 = vpack.c.b16 %v560, %v559
  %v566 = vsel %vm145, %v547, 0
  %568 = vmatpush.bf16.msra.mxu0 0
  %569 = vmatpush.bf16.msra.mxu0 0
  %570 = vmatpush.bf16.msra.mxu0 0
  %571 = vmatpush.bf16.msra.mxu0 0
  %572 = vmatpush.bf16.msra.mxu0 0
  %573 = vmatpush.bf16.msra.mxu0 0
  %574 = vmatpush.bf16.msra.mxu0 %v562
  %575 = vmatpush.bf16.msra.mxu0 %v561
  %576 = vmatmul.bf16.gmra.mxu0 %v566
  %v577 = vpop.f32.mrf.mxu0
  %v578 = vadd.f32 0.0, %v577
  %v579 = vpop.f32.mrf.mxu0
  %580 = vdwg.mxu0
  %v581 = vadd.f32 %v511, %v578
  %v582 = vadd.f32 %v115, %v130
  %583 = vmatpush.bf16.msra.mxu0 0
  %584 = vmatpush.bf16.msra.mxu0 0
  %585 = vmatpush.bf16.msra.mxu0 0
  %586 = vmatpush.bf16.msra.mxu0 0
  %587 = vmatpush.bf16.msra.mxu0 0
  %588 = vmatpush.bf16.msra.mxu0 0
  %589 = vmatpush.bf16.msra.mxu0 %v142
  %590 = vmatpush.bf16.msra.mxu0 %v141
  %591 = vmatmul.bf16.gmra.mxu0 %v530
  %v592 = vpop.f32.mrf.mxu0
  %v593 = vadd.f32 0.0, %v592
  %v594 = vpop.f32.mrf.mxu0
  %595 = vdwg.mxu0
  %v596 = vadd.f32 %v582, %v593
  %v597 = vtanh.pop %v596
  %v598 = vpack.c.bf16 %v597, %v597
  %v600 = vsel %vm145, %v598, 0
  %602 = vmatpush.bf16.msra.mxu0 0
  %603 = vmatpush.bf16.msra.mxu0 0
  %604 = vmatpush.bf16.msra.mxu0 0
  %605 = vmatpush.bf16.msra.mxu0 0
  %606 = vmatpush.bf16.msra.mxu0 0
  %607 = vmatpush.bf16.msra.mxu0 0
  %608 = vmatpush.bf16.msra.mxu0 %v177
  %609 = vmatpush.bf16.msra.mxu0 %v176
  %610 = vmatmul.bf16.gmra.mxu0 %v600
  %v611 = vpop.f32.mrf.mxu0
  %v612 = vadd.f32 %v166, %v611
  %v613 = vpop.f32.mrf.mxu0
  %614 = vdwg.mxu0
  %v615 = vadd.f32 %v612, %v578
  %v616 = vtanh.pop %v615
  %v617 = vpack.c.bf16 %v616, %v616
  %s618 = scalar_lea.vmem %s6, 96
  %v619 = vld [vmem:[%s618] sm:$0xf]
  %v620 = vld [vmem:[%s618 + $0x4] sm:$0xf]
  %v621 = vld [vmem:[%s618 + $0x8] sm:$0xf]
  %v622 = vld [vmem:[%s618 + $0xc] sm:$0xf]
  %v627 = vunpack.c.l.b16 %v619
  %v628 = vunpack.c.l.b16 %v620
  %v629 = vunpack.c.l.b16 %v621
  %v630 = vunpack.c.l.b16 %v622
  %v631 = vpack.c.b16 %v628, %v627
  %v632 = vpack.c.b16 %v630, %v629
  %v636 = vsel %vm145, %v617, 0
  %638 = vmatpush.bf16.msra.mxu0 0
  %639 = vmatpush.bf16.msra.mxu0 0
  %640 = vmatpush.bf16.msra.mxu0 0
  %641 = vmatpush.bf16.msra.mxu0 0
  %642 = vmatpush.bf16.msra.mxu0 0
  %643 = vmatpush.bf16.msra.mxu0 0
  %644 = vmatpush.bf16.msra.mxu0 %v632
  %645 = vmatpush.bf16.msra.mxu0 %v631
  %646 = vmatmul.bf16.gmra.mxu0 %v636
  %v647 = vpop.f32.mrf.mxu0
  %v648 = vadd.f32 0.0, %v647
  %v649 = vpop.f32.mrf.mxu0
  %650 = vdwg.mxu0
  %v651 = vadd.f32 %v581, %v648
  %v652 = vadd.f32 %v117, %v130
  %653 = vmatpush.bf16.msra.mxu0 0
  %654 = vmatpush.bf16.msra.mxu0 0
  %655 = vmatpush.bf16.msra.mxu0 0
  %656 = vmatpush.bf16.msra.mxu0 0
  %657 = vmatpush.bf16.msra.mxu0 0
  %658 = vmatpush.bf16.msra.mxu0 0
  %659 = vmatpush.bf16.msra.mxu0 %v142
  %660 = vmatpush.bf16.msra.mxu0 %v141
  %661 = vmatmul.bf16.gmra.mxu0 %v600
  %v662 = vpop.f32.mrf.mxu0
  %v663 = vadd.f32 0.0, %v662
  %v664 = vpop.f32.mrf.mxu0
  %665 = vdwg.mxu0
  %v666 = vadd.f32 %v652, %v663
  %v667 = vtanh.pop %v666
  %v668 = vpack.c.bf16 %v667, %v667
  %v670 = vsel %vm145, %v668, 0
  %672 = vmatpush.bf16.msra.mxu0 0
  %673 = vmatpush.bf16.msra.mxu0 0
  %674 = vmatpush.bf16.msra.mxu0 0
  %675 = vmatpush.bf16.msra.mxu0 0
  %676 = vmatpush.bf16.msra.mxu0 0
  %677 = vmatpush.bf16.msra.mxu0 0
  %678 = vmatpush.bf16.msra.mxu0 %v177
  %679 = vmatpush.bf16.msra.mxu0 %v176
  %680 = vmatmul.bf16.gmra.mxu0 %v670
  %v681 = vpop.f32.mrf.mxu0
  %v682 = vadd.f32 %v166, %v681
  %v683 = vpop.f32.mrf.mxu0
  %684 = vdwg.mxu0
  %v685 = vadd.f32 %v682, %v648
  %v686 = vtanh.pop %v685
  %v687 = vpack.c.bf16 %v686, %v686
  %s688 = scalar_lea.vmem %s6, 112
  %v689 = vld [vmem:[%s688] sm:$0xf]
  %v690 = vld [vmem:[%s688 + $0x4] sm:$0xf]
  %v691 = vld [vmem:[%s688 + $0x8] sm:$0xf]
  %v692 = vld [vmem:[%s688 + $0xc] sm:$0xf]
  %v697 = vunpack.c.l.b16 %v689
  %v698 = vunpack.c.l.b16 %v690
  %v699 = vunpack.c.l.b16 %v691
  %v700 = vunpack.c.l.b16 %v692
  %v701 = vpack.c.b16 %v698, %v697
  %v702 = vpack.c.b16 %v700, %v699
  %v706 = vsel %vm145, %v687, 0
  %708 = vmatpush.bf16.msra.mxu0 0
  %709 = vmatpush.bf16.msra.mxu0 0
  %710 = vmatpush.bf16.msra.mxu0 0
  %711 = vmatpush.bf16.msra.mxu0 0
  %712 = vmatpush.bf16.msra.mxu0 0
  %713 = vmatpush.bf16.msra.mxu0 0
  %714 = vmatpush.bf16.msra.mxu0 %v702
  %715 = vmatpush.bf16.msra.mxu0 %v701
  %716 = vmatmul.bf16.gmra.mxu0 %v706
  %v717 = vpop.f32.mrf.mxu0
  %v718 = vadd.f32 0.0, %v717
  %v719 = vpop.f32.mrf.mxu0
  %720 = vdwg.mxu0
  %v721 = vadd.f32 %v651, %v718
  %v722 = vld [vmem:[%s7] sm:$0x1]
  %v724 = vperm.slane %v722, 0
  %725 = vrot.lane.b32.xlu0 %v724, 32
  %v726 = vpop.permute.xlu0 %725
  %v728 = vadd.f32 %v721, %v726
  %730 = vrot.lane.b32.xlu0 %v728, 96
  %v731 = vpop.permute.xlu0 %730
  %vm733 = vcmask 80896
  %734 = vst.msk [vmem:[%s8] sm:$0xff] %vm733, %v731
  // Predicated region
  $region34: #{rnn_forward.1} parent=0 // pred_check
    _
  $region35: #{rnn_forward.1} parent=0 // pred_check_branch
    %736 = sbr.rel (0) target = $region37
  $region36: #{rnn_forward.1} parent=0 // pred_region
    _
  $region37: #{rnn_forward.1} parent=0 // pred_fallthru
    _
  // Predicated region
  $region38: #{rnn_forward.1} parent=0 // pred_check
    _
  $region39: #{rnn_forward.1} parent=0 // pred_check_branch
    %738 = sbr.rel (0) target = $region41
  $region40: #{rnn_forward.1} parent=0 // pred_region
    _
  $region41: #{rnn_forward.1} parent=0 // pred_fallthru
    _

</llo_original>
